<compile_context>
chip_gen: v6e
topology: v6e:2x2x1
jax: 0.10.0
libtpu: 0.0.40
codegen_flags: <defaults>
</compile_context>

<pallas_src>
import math

import jax
import jax.numpy as jnp
from jax.experimental import pallas as pl
from jax.experimental.pallas import tpu as pltpu

LANES = 128
MAX_ROW_TILE = 2048   # rows per grid step; 2048*128*4B = 1 MiB per input tile
N_SLICES = 2          # leading "parallel" axis (2 TensorCores on v7x)


def _dice_partial_kernel(x_ref, t_ref, inter_ref, denom_ref):
    """Accumulate per-slice partial sums of sigmoid(x)*t and sigmoid(x)+t.

    inter_ref / denom_ref are (8, 128) f32 output blocks that stay resident
    across the inner ("arbitrary") grid axis, acting as vector accumulators.
    """
    i = pl.program_id(1)

    @pl.when(i == 0)
    def _():
        inter_ref[...] = jnp.zeros_like(inter_ref)
        denom_ref[...] = jnp.zeros_like(denom_ref)

    p = jax.nn.sigmoid(x_ref[...].astype(jnp.float32))
    t = t_ref[...].astype(jnp.float32)

    # Partial-reduce the (row_tile, 128) tile to a single (8, 128) vreg with
    # leading-axis (pure elementwise, VPU-only) adds — no XLU, no SMEM scalars.
    groups = x_ref.shape[0] // 8
    inter_ref[...] += (p * t).reshape(groups, 8, LANES).sum(axis=0)
    denom_ref[...] += (p + t).reshape(groups, 8, LANES).sum(axis=0)


def soft_dice_loss(logits, targets, smooth=1.0):
    """Pallas implementation of SoftDiceLoss.forward (returns a scalar f32)."""
    assert logits.shape == targets.shape
    num = logits.shape[0]
    total = math.prod(logits.shape)

    # Lane-dense layout: rows of 128 lanes, padded to whole tiles per slice.
    rows = -(-total // LANES)
    row_tile = min(MAX_ROW_TILE, ((rows + 7) // 8) * 8)
    blocks = -(-rows // row_tile)
    n_slices = N_SLICES if blocks >= N_SLICES else 1
    blocks_per_slice = -(-blocks // n_slices)
    rows_padded = n_slices * blocks_per_slice * row_tile
    pad = rows_padded * LANES - total

    x_flat = logits.reshape(-1)
    t_flat = targets.reshape(-1)
    if pad:
        # sigmoid(-1e30) == 0 exactly in f32 and the padded targets are 0, so
        # padding contributes nothing to sum(p*t) or sum(p+t).
        x_flat = jnp.pad(x_flat, (0, pad), constant_values=-1e30)
        t_flat = jnp.pad(t_flat, (0, pad), constant_values=0)
    x2d = x_flat.reshape(rows_padded, LANES)
    t2d = t_flat.reshape(rows_padded, LANES)

    def in_map(s, i):
        return (s * blocks_per_slice + i, 0)

    inter_part, denom_part = pl.pallas_call(
        _dice_partial_kernel,
        out_shape=(
            jax.ShapeDtypeStruct((n_slices, 8, LANES), jnp.float32),
            jax.ShapeDtypeStruct((n_slices, 8, LANES), jnp.float32),
        ),
        grid_spec=pltpu.PrefetchScalarGridSpec(
            num_scalar_prefetch=0,
            grid=(n_slices, blocks_per_slice),
            in_specs=[
                pl.BlockSpec((row_tile, LANES), in_map),
                pl.BlockSpec((row_tile, LANES), in_map),
            ],
            out_specs=[
                pl.BlockSpec((None, 8, LANES), lambda s, i: (s, 0, 0)),
                pl.BlockSpec((None, 8, LANES), lambda s, i: (s, 0, 0)),
            ],
        ),
        compiler_params=pltpu.CompilerParams(
            dimension_semantics=("parallel", "arbitrary")),
    )(x2d, t2d)

    # Tiny scalar epilogue in plain JAX: one cross-lane reduce per quantity
    # plus the dice combine (matches the PyTorch module semantics).
    intersection = jnp.sum(inter_part)
    denom = jnp.sum(denom_part)
    score = (2.0 * intersection + smooth) / (denom + smooth)
    return 1.0 - score / num


def soft_dice_loss_ref(logits, targets, smooth=1.0):
    """Plain-JAX reference mirroring the PyTorch module exactly."""
    probs = jax.nn.sigmoid(logits.astype(jnp.float32))
    num = logits.shape[0]
    m1 = probs.reshape(num, -1)
    m2 = targets.reshape(num, -1).astype(jnp.float32)
    intersection = jnp.sum(m1 * m2)
    score = (2.0 * intersection + smooth) / (jnp.sum(m1) + jnp.sum(m2) + smooth)
    return 1.0 - score / num


if __name__ == "__main__":
    key = jax.random.PRNGKey(0)
    k1, k2 = jax.random.split(key)

    # NCHW: batch=2, channels=4, spatial=16x16
    logits = jax.random.normal(k1, (2, 4, 16, 16), dtype=jnp.float32)
    targets = (jax.random.uniform(k2, (2, 4, 16, 16)) > 0.5).astype(jnp.float32)

    loss = jax.block_until_ready(soft_dice_loss(logits, targets, smooth=1.0))
    ref = jax.block_until_ready(soft_dice_loss_ref(logits, targets, smooth=1.0))

    assert jnp.allclose(loss, ref, rtol=1e-5, atol=1e-5), (loss, ref)
    print("KERNEL_OK")
</pallas_src>

<mosaic_0001>
module attributes {stable_mosaic.version = 11 : i64} {
  func.func @_dice_partial_kernel(%arg0: i32, %arg1: i32, %arg2: memref<16x128xf32, #tpu.memory_space<vmem>>, %arg3: memref<16x128xf32, #tpu.memory_space<vmem>>, %arg4: memref<1x8x128xf32, #tpu.memory_space<vmem>>, %arg5: memref<1x8x128xf32, #tpu.memory_space<vmem>>) attributes {dimension_semantics = [#tpu.dimension_semantics<parallel>, #tpu.dimension_semantics<arbitrary>], iteration_bounds = array<i64: 1, 1>, scalar_prefetch = 0 : i64, scratch_operands = 0 : i64, tpu.core_type = #tpu.core_type<tc>, window_params = [{transform_indices = @transform_0, window_bounds = array<i64: 16, 128>}, {transform_indices = @transform_1, window_bounds = array<i64: 16, 128>}, {transform_indices = @transform_2, window_bounds = array<i64: 1, 8, 128>}, {transform_indices = @transform_3, window_bounds = array<i64: 1, 8, 128>}]} {
    %c0_i32 = arith.constant 0 : i32
    %0 = arith.cmpi eq, %arg1, %c0_i32 : i32
    %1 = arith.extui %0 : i1 to i32
    %c0_i32_0 = arith.constant 0 : i32
    %2 = arith.cmpi ne, %1, %c0_i32_0 : i32
    scf.if %2 {
      %cst_18 = arith.constant 0.000000e+00 : f32
      %28 = vector.broadcast %cst_18 : f32 to vector<8x128xf32>
      %c0_19 = arith.constant 0 : index
      %c0_20 = arith.constant 0 : index
      %c0_21 = arith.constant 0 : index
      %29 = vector.load %arg4[%c0_19, %c0_20, %c0_21] : memref<1x8x128xf32, #tpu.memory_space<vmem>>, vector<1x8x128xf32>
      %30 = vector.shape_cast %29 : vector<1x8x128xf32> to vector<8x128xf32>
      %31 = vector.shape_cast %28 : vector<8x128xf32> to vector<1x8x128xf32>
      tpu.vector_store %arg4[%c0_19, %c0_20, %c0_21], %31 {strides = array<i32>} : memref<1x8x128xf32, #tpu.memory_space<vmem>>, vector<1x8x128xf32>,
      %cst_22 = arith.constant 0.000000e+00 : f32
      %32 = vector.broadcast %cst_22 : f32 to vector<8x128xf32>
      %c0_23 = arith.constant 0 : index
      %c0_24 = arith.constant 0 : index
      %c0_25 = arith.constant 0 : index
      %33 = vector.load %arg5[%c0_23, %c0_24, %c0_25] : memref<1x8x128xf32, #tpu.memory_space<vmem>>, vector<1x8x128xf32>
      %34 = vector.shape_cast %33 : vector<1x8x128xf32> to vector<8x128xf32>
      %35 = vector.shape_cast %32 : vector<8x128xf32> to vector<1x8x128xf32>
      tpu.vector_store %arg5[%c0_23, %c0_24, %c0_25], %35 {strides = array<i32>} : memref<1x8x128xf32, #tpu.memory_space<vmem>>, vector<1x8x128xf32>,
    } else {
    }
    %c0 = arith.constant 0 : index
    %c0_1 = arith.constant 0 : index
    %3 = vector.load %arg2[%c0, %c0_1] : memref<16x128xf32, #tpu.memory_space<vmem>>, vector<16x128xf32>
    %4 = arith.negf %3 : vector<16x128xf32>
    %5 = math.exp %4 : vector<16x128xf32>
    %cst = arith.constant 1.000000e+00 : f32
    %6 = vector.broadcast %cst : f32 to vector<16x128xf32>
    %7 = arith.addf %6, %5 : vector<16x128xf32>
    %8 = arith.divf %6, %7 : vector<16x128xf32>
    %c0_2 = arith.constant 0 : index
    %c0_3 = arith.constant 0 : index
    %9 = vector.load %arg3[%c0_2, %c0_3] : memref<16x128xf32, #tpu.memory_space<vmem>>, vector<16x128xf32>
    %c0_4 = arith.constant 0 : index
    %c0_5 = arith.constant 0 : index
    %c0_6 = arith.constant 0 : index
    %10 = vector.load %arg4[%c0_4, %c0_5, %c0_6] : memref<1x8x128xf32, #tpu.memory_space<vmem>>, vector<1x8x128xf32>
    %11 = vector.shape_cast %10 : vector<1x8x128xf32> to vector<8x128xf32>
    %12 = arith.mulf %8, %9 : vector<16x128xf32>
    %13 = vector.shape_cast %12 : vector<16x128xf32> to vector<2x8x128xf32>
    %cst_7 = arith.constant dense<0.000000e+00> : vector<8x128xf32>
    %14 = vector.multi_reduction <add>, %13, %cst_7 [0] : vector<2x8x128xf32> to vector<8x128xf32>
    %15 = arith.addf %11, %14 : vector<8x128xf32>
    %c0_8 = arith.constant 0 : index
    %c0_9 = arith.constant 0 : index
    %c0_10 = arith.constant 0 : index
    %16 = vector.load %arg4[%c0_8, %c0_9, %c0_10] : memref<1x8x128xf32, #tpu.memory_space<vmem>>, vector<1x8x128xf32>
    %17 = vector.shape_cast %16 : vector<1x8x128xf32> to vector<8x128xf32>
    %18 = vector.shape_cast %15 : vector<8x128xf32> to vector<1x8x128xf32>
    tpu.vector_store %arg4[%c0_8, %c0_9, %c0_10], %18 {strides = array<i32>} : memref<1x8x128xf32, #tpu.memory_space<vmem>>, vector<1x8x128xf32>,
    %c0_11 = arith.constant 0 : index
    %c0_12 = arith.constant 0 : index
    %c0_13 = arith.constant 0 : index
    %19 = vector.load %arg5[%c0_11, %c0_12, %c0_13] : memref<1x8x128xf32, #tpu.memory_space<vmem>>, vector<1x8x128xf32>
    %20 = vector.shape_cast %19 : vector<1x8x128xf32> to vector<8x128xf32>
    %21 = arith.addf %8, %9 : vector<16x128xf32>
    %22 = vector.shape_cast %21 : vector<16x128xf32> to vector<2x8x128xf32>
    %cst_14 = arith.constant dense<0.000000e+00> : vector<8x128xf32>
    %23 = vector.multi_reduction <add>, %22, %cst_14 [0] : vector<2x8x128xf32> to vector<8x128xf32>
    %24 = arith.addf %20, %23 : vector<8x128xf32>
    %c0_15 = arith.constant 0 : index
    %c0_16 = arith.constant 0 : index
    %c0_17 = arith.constant 0 : index
    %25 = vector.load %arg5[%c0_15, %c0_16, %c0_17] : memref<1x8x128xf32, #tpu.memory_space<vmem>>, vector<1x8x128xf32>
    %26 = vector.shape_cast %25 : vector<1x8x128xf32> to vector<8x128xf32>
    %27 = vector.shape_cast %24 : vector<8x128xf32> to vector<1x8x128xf32>
    tpu.vector_store %arg5[%c0_15, %c0_16, %c0_17], %27 {strides = array<i32>} : memref<1x8x128xf32, #tpu.memory_space<vmem>>, vector<1x8x128xf32>,
    return
  }
  func.func @transform_0(%arg0: i32, %arg1: i32) -> (i32, i32) {
    %c1_i32 = arith.constant 1 : i32
    %0 = arith.muli %arg0, %c1_i32 : i32
    %1 = arith.addi %0, %arg1 : i32
    %c0_i32 = arith.constant 0 : i32
    %c0_i32_0 = arith.constant 0 : i32
    return %1, %c0_i32 : i32, i32
  }
  func.func @transform_1(%arg0: i32, %arg1: i32) -> (i32, i32) {
    %c1_i32 = arith.constant 1 : i32
    %0 = arith.muli %arg0, %c1_i32 : i32
    %1 = arith.addi %0, %arg1 : i32
    %c0_i32 = arith.constant 0 : i32
    %c0_i32_0 = arith.constant 0 : i32
    return %1, %c0_i32 : i32, i32
  }
  func.func @transform_2(%arg0: i32, %arg1: i32) -> (i32, i32, i32) {
    %c0_i32 = arith.constant 0 : i32
    %c0_i32_0 = arith.constant 0 : i32
    %c0_i32_1 = arith.constant 0 : i32
    return %arg0, %c0_i32, %c0_i32_0 : i32, i32, i32
  }
  func.func @transform_3(%arg0: i32, %arg1: i32) -> (i32, i32, i32) {
    %c0_i32 = arith.constant 0 : i32
    %c0_i32_0 = arith.constant 0 : i32
    %c0_i32_1 = arith.constant 0 : i32
    return %arg0, %c0_i32, %c0_i32_0 : i32, i32, i32
  }
}

</mosaic_0001>

<llo_original>
// kernel: tpu_custom_call.1
$region0: #{tpu_custom_call.1}
  #allocation0 [shape = 'u32[]', space=smem, size = 0x4, offset = 0x4, fixed_abs, tag = 'smem constant byte address 0x4 - core index']
  #allocation1 [shape = 'u32[144,128]{1,0:T(1,128)}', space=vmem, size = 0x12000, scoped, tag = 'internal scratch']
  %s0 = inlined_call_operand.hbm [shape: f32[16,128], index: 0, kind: input, shape index: {}]
  %s1 = inlined_call_operand.hbm [shape: f32[16,128], index: 1, kind: input, shape index: {}]
  %s2 = inlined_call_operand.hbm [shape: f32[1,8,128], index: 2, kind: output, shape index: {0}]
  %s3 = inlined_call_operand.hbm [shape: f32[1,8,128], index: 3, kind: output, shape index: {1}]
  %4 = xla_tuple %s2, %s3
  %s5 = sld [smem:[#allocation0]]
  $region38: #{tpu_custom_call.1} parent=0
    _
  %s7 = ssub.s32 1, %s5
  %s8 = scalar_select 0, %s7, %s5
  $region1: #{tpu_custom_call.1} parent=0
    #allocation2 [shape = 'u8[8192]{0}', space=vmem, size = 0x2000, scoped, tag = 'input window, operand 0, single buffered']
    #allocation3 [shape = 's32[1]{0}', space=sflag, size = 0x4, scoped, tag = 'scoped memory for tpu_custom_call.1']
    #allocation4 [shape = 's32[1]{0}', space=sflag, size = 0x4, scoped, tag = 'scoped memory for tpu_custom_call.1']
    #allocation5 [shape = 'u8[8192]{0}', space=vmem, size = 0x2000, scoped, tag = 'input window, operand 1, single buffered']
    #allocation6 [shape = 's32[1]{0}', space=sflag, size = 0x4, scoped, tag = 'scoped memory for tpu_custom_call.1']
    #allocation7 [shape = 'u8[4096]{0}', space=vmem, size = 0x1000, scoped, tag = 'output window, operand 0, single buffered']
    #allocation8 [shape = 'u8[4096]{0}', space=vmem, size = 0x1000, scoped, tag = 'output window, operand 1, single buffered']
    #allocation9 [shape = 's32[1]{0}', space=sflag, size = 0x4, scoped, tag = 'scoped memory for tpu_custom_call.1']
    %9 = vsyncpa [#allocation3], 0
    %10 = vsyncpa [#allocation6], 0
    %11 = vsyncpa [#allocation4], 0
    %12 = vsyncpa [#allocation9], 0
    // Predicated region
    $region2: #{tpu_custom_call.1} parent=1 // pred_check
      _
    $region3: #{tpu_custom_call.1} parent=1 // pred_check_branch
      %14 = sbr.rel (0) target = $region5
    $region4: #{tpu_custom_call.1} parent=1 // pred_region
      %s15 = sadd.s32 0, 0
      %s16 = smul.u32 2, %s15
      %s18 = ssub.s32 256, 256
      %19 = vsyncadd [#allocation3], %s18
      %s20 = smul.addr %s16, 128
      %s21 = scalar_lea.hbm %s0, %s20
      %s22 = sshll.u32 [#allocation2], 4
      %s23 = int_to_ptr.vmem [resolvable:$true] %s22
      %28 = dma.hbm_to_vmem [thread:$0]  %s21, 256, %s23, [#allocation3], 128, 128, 8
    $region5: #{tpu_custom_call.1} parent=1 // pred_fallthru
      _
    // Predicated region
    $region6: #{tpu_custom_call.1} parent=1 // pred_check
      _
    $region7: #{tpu_custom_call.1} parent=1 // pred_check_branch
      %30 = sbr.rel (0) target = $region9
    $region8: #{tpu_custom_call.1} parent=1 // pred_region
      %s31 = sadd.s32 0, 0
      %s32 = smul.u32 2, %s31
      %s34 = ssub.s32 256, 256
      %35 = vsyncadd [#allocation6], %s34
      %s36 = smul.addr %s32, 128
      %s37 = scalar_lea.hbm %s1, %s36
      %s38 = sshll.u32 [#allocation5], 4
      %s39 = int_to_ptr.vmem [resolvable:$true] %s38
      %44 = dma.hbm_to_vmem [thread:$0]  %s37, 256, %s39, [#allocation6], 128, 128, 8
    $region9: #{tpu_custom_call.1} parent=1 // pred_fallthru
      _
    // Predicated region
    $region10: #{tpu_custom_call.1} parent=1 // pred_check
      _
    $region11: #{tpu_custom_call.1} parent=1 // pred_check_branch
      %46 = sbr.rel (0) target = $region13
    $region12: #{tpu_custom_call.1} parent=1 // pred_region
      %47 = dma.done [#allocation3], 256
    $region13: #{tpu_custom_call.1} parent=1 // pred_fallthru
      _
    // Predicated region
    $region14: #{tpu_custom_call.1} parent=1 // pred_check
      _
    $region15: #{tpu_custom_call.1} parent=1 // pred_check_branch
      %49 = sbr.rel (0) target = $region17
    $region16: #{tpu_custom_call.1} parent=1 // pred_region
      %50 = dma.done [#allocation6], 256
    $region17: #{tpu_custom_call.1} parent=1 // pred_fallthru
      _
    %s51 = sadd.s32 0, 0
    %s52 = smul.u32 2, %s51
    %s53 = sadd.s32 0, 0
    %s54 = smul.u32 2, %s53
    %p55 = scmp.eq.s32.totalorder 0, 0
    // Predicated region
    $region18: #{tpu_custom_call.1} parent=1 // pred_check
      %p56 = pneg %p55
    $region19: #{tpu_custom_call.1} parent=1 // pred_check_branch
      %58 = sbr.rel (%p56) target = $region21
    $region20: #{tpu_custom_call.1} parent=1 // pred_region
      %59 = vst [vmem:[#allocation7] sm:$0xff] 0.0
      %60 = vst [vmem:[#allocation8] sm:$0xff] 0.0
    $region21: #{tpu_custom_call.1} parent=1 // pred_fallthru
      _
    %v61 = vld [vmem:[#allocation2] sm:$0xff]
    %v62 = vld [vmem:[#allocation2 + $0x8] sm:$0xff]
    %v63 = vxor.u32 %v61, 2147483648
    %v64 = vxor.u32 %v62, 2147483648
    %v65 = vmul.f32 %v63, 1.442695
    %v66 = vpow.pop %v65
    %v67 = vmul.f32 %v64, 1.442695
    %v68 = vpow.pop %v67
    %v69 = vadd.f32 %v66, 1.0
    %v70 = vadd.f32 %v68, 1.0
    %v71 = vrcp.pop %v69
    %v72 = vmul.f32 1.0, %v71
    %v73 = vrcp.pop %v70
    %v74 = vmul.f32 1.0, %v73
    %v75 = vld [vmem:[#allocation5] sm:$0xff]
    %v76 = vld [vmem:[#allocation5 + $0x8] sm:$0xff]
    %v77 = vld [vmem:[#allocation7] sm:$0xff]
    %v78 = vmul.f32 %v72, %v75
    %v79 = vmul.f32 %v74, %v76
    %v80 = vadd.f32 %v78, %v79
    %v81 = vadd.f32 %v77, %v80
    %82 = vst [vmem:[#allocation7] sm:$0xff] %v81
    %v83 = vld [vmem:[#allocation8] sm:$0xff]
    %v84 = vadd.f32 %v72, %v75
    %v85 = vadd.f32 %v74, %v76
    %v86 = vadd.f32 %v84, %v85
    %v87 = vadd.f32 %v83, %v86
    %88 = vst [vmem:[#allocation8] sm:$0xff] %v87
    // Predicated region
    $region22: #{tpu_custom_call.1} parent=1 // pred_check
      _
    $region23: #{tpu_custom_call.1} parent=1 // pred_check_branch
      %90 = sbr.rel (0) target = $region25
    $region24: #{tpu_custom_call.1} parent=1 // pred_region
      %s92 = ssub.s32 128, 128
      %93 = vsyncadd [#allocation4], %s92
      %s95 = sshll.u32 [#allocation7], 4
      %s96 = int_to_ptr.vmem [resolvable:$true] %s95
      %98 = dma.vmem_to_hbm [thread:$0]  %s96, 128, %s2, [#allocation4]
    $region25: #{tpu_custom_call.1} parent=1 // pred_fallthru
      _
    // Predicated region
    $region26: #{tpu_custom_call.1} parent=1 // pred_check
      _
    $region27: #{tpu_custom_call.1} parent=1 // pred_check_branch
      %100 = sbr.rel (0) target = $region29
    $region28: #{tpu_custom_call.1} parent=1 // pred_region
      %s102 = ssub.s32 128, 128
      %103 = vsyncadd [#allocation9], %s102
      %s105 = sshll.u32 [#allocation8], 4
      %s106 = int_to_ptr.vmem [resolvable:$true] %s105
      %108 = dma.vmem_to_hbm [thread:$0]  %s106, 128, %s3, [#allocation9]
    $region29: #{tpu_custom_call.1} parent=1 // pred_fallthru
      _
    // Predicated region
    $region30: #{tpu_custom_call.1} parent=1 // pred_check
      _
    $region31: #{tpu_custom_call.1} parent=1 // pred_check_branch
      %110 = sbr.rel (0) target = $region33
    $region32: #{tpu_custom_call.1} parent=1 // pred_region
      %111 = dma.done [#allocation4], 128
    $region33: #{tpu_custom_call.1} parent=1 // pred_fallthru
      _
    // Predicated region
    $region34: #{tpu_custom_call.1} parent=1 // pred_check
      _
    $region35: #{tpu_custom_call.1} parent=1 // pred_check_branch
      %113 = sbr.rel (0) target = $region37
    $region36: #{tpu_custom_call.1} parent=1 // pred_region
      %114 = dma.done [#allocation9], 128
    $region37: #{tpu_custom_call.1} parent=1 // pred_fallthru
      _
    %115 = vsyncpa [#allocation3], 1
    %116 = vsyncpa [#allocation6], 1
    %117 = vsyncpa [#allocation4], 1
    %118 = vsyncpa [#allocation9], 1

</llo_original>
